<compile_context>
chip_gen: v7x
topology: tpu7x:2x2x1
jax: 0.10.0
libtpu: 0.0.40
codegen_flags: <defaults>
</compile_context>

<pallas_src>
import functools

import jax
import jax.numpy as jnp
from jax import lax
from jax.experimental import pallas as pl
from jax.experimental.pallas import tpu as pltpu

LANE = 128


def _round_up(x, m):
    return (x + m - 1) // m * m


def dual_encoder_loss_kernel(text_ref, cells_ref,
                             w1_ref, b1_ref, w2_ref, b2_ref,
                             wc_ref, bc_ref,
                             loss_ref, *, batch):
    # ---- text tower: Linear -> ReLU -> Linear (bf16 MXU inputs, f32 accumulate) ----
    h = jnp.dot(text_ref[...], w1_ref[...],
                preferred_element_type=jnp.float32) + b1_ref[...]          # (B, HID_P) f32
    h = jnp.maximum(h, 0.0)                                                # ReLU (f32 VPU)
    t_emb = (jnp.dot(h.astype(jnp.bfloat16), w2_ref[...],
                     preferred_element_type=jnp.float32) + b2_ref[...])    # (B, OUT_P) f32

    # ---- cell tower: pos / neighbor / far fused into one (3B, s2cell) matmul ----
    # kept 2D throughout (no (3,B,OUT_P) reshape) to preserve (8,128) layout.
    c_all = (jnp.dot(cells_ref[...], wc_ref[...],
                     preferred_element_type=jnp.float32) + bc_ref[...])    # (3B, OUT_P) f32

    # ---- cosine similarity along the feature axis (torch eps = 1e-8) ----
    # rsqrt(max(x, eps^2)) == 1 / max(sqrt(x), eps)  (sqrt is monotone)
    eps2 = 1e-16
    t_sq = jnp.sum(t_emb * t_emb, axis=-1, keepdims=True)                  # (B, 1)
    inv_nt = lax.rsqrt(jnp.maximum(t_sq, eps2))                            # hoisted: once

    # replicate text embedding / inverse norm along rows to match (3B, ...)
    t_rep = jnp.concatenate([t_emb, t_emb, t_emb], axis=0)                 # (3B, OUT_P)
    inv_nt_rep = jnp.concatenate([inv_nt, inv_nt, inv_nt], axis=0)         # (3B, 1)

    num = jnp.sum(c_all * t_rep, axis=-1, keepdims=True)                   # (3B, 1)
    c_sq = jnp.sum(c_all * c_all, axis=-1, keepdims=True)                  # (3B, 1)
    inv_nc = lax.rsqrt(jnp.maximum(c_sq, eps2))
    cos = num * inv_nc * inv_nt_rep                                        # (3B, 1)

    # CosineEmbeddingLoss (margin=0, reduction='mean'):
    #   target=+1 -> 1 - cos ; target=-1 -> max(0, cos)
    # contract: row order of cells_ref is [cellid, neighbor, far] (see wrapper).
    loss_pos = jnp.mean(1.0 - cos[0:batch])
    loss_ngb = jnp.mean(jnp.maximum(cos[batch:2 * batch], 0.0))
    loss_far = jnp.mean(jnp.maximum(cos[2 * batch:3 * batch], 0.0))

    loss_ref[0] = loss_pos + loss_ngb + loss_far


def prepare_params(params):
    """One-time (init-path) padding + bf16 cast of Linear weights.

    Zero-pads hidden/output feature dims to lane multiples (zeros contribute 0 to
    dots and norms, so cosine numerics are unchanged) and stores matmul weights as
    bf16 (MXU-native); biases stay f32.  Call ONCE and reuse the result each step.
    """
    w1, b1, w2, b2, wc, bc = (params[k] for k in ("w1", "b1", "w2", "b2", "wc", "bc"))
    text_dim, hidden_dim = w1.shape
    s2cell_dim = wc.shape[0]
    output_dim = w2.shape[1]

    hid_p = _round_up(hidden_dim, LANE)   # 200 -> 256
    out_p = _round_up(output_dim, LANE)   # 100 -> 128

    def pad2(a, rows, cols, dtype):
        return jnp.zeros((rows, cols), dtype).at[:a.shape[0], :a.shape[1]].set(a.astype(dtype))

    kp = dict(
        w1=pad2(w1, text_dim, hid_p, jnp.bfloat16),
        b1=pad2(b1, 1, hid_p, jnp.float32),
        w2=pad2(w2, hid_p, out_p, jnp.bfloat16),
        b2=pad2(b2, 1, out_p, jnp.float32),
        wc=pad2(wc, s2cell_dim, out_p, jnp.bfloat16),
        bc=pad2(bc, 1, out_p, jnp.float32),
        dims=dict(text_dim=text_dim, s2cell_dim=s2cell_dim, hid_p=hid_p, out_p=out_p),
    )
    # Materialize once so the pad/cast cost is paid at init, not inside a jit step.
    return jax.tree_util.tree_map(
        lambda x: jax.block_until_ready(x) if isinstance(x, jax.Array) else x, kp)


def dual_encoder_loss(text_feat, cellid, neighbor_cells, far_cells, kparams):
    """Pallas wrapper. `kparams` must come from prepare_params() (padded bf16 weights)."""
    dims = kparams["dims"]
    text_dim, s2cell_dim = dims["text_dim"], dims["s2cell_dim"]
    hid_p, out_p = dims["hid_p"], dims["out_p"]
    batch = text_feat.shape[0]

    # Activations cast to bf16 here (wrapper), not inside the kernel: halves the
    # activation DMA and removes in-kernel VPU pack ops.
    # Row-order contract consumed by the kernel: [cellid, neighbor, far].
    cells_all = jnp.concatenate(
        [cellid.astype(jnp.bfloat16),
         neighbor_cells.astype(jnp.bfloat16),
         far_cells.astype(jnp.bfloat16)], axis=0)                          # (3B, s2cell)

    operands = (text_feat.astype(jnp.bfloat16), cells_all,
                kparams["w1"], kparams["b1"], kparams["w2"], kparams["b2"],
                kparams["wc"], kparams["bc"])

    flops = (2 * batch * (text_dim * hid_p + hid_p * out_p)
             + 2 * 3 * batch * s2cell_dim * out_p)
    bytes_accessed = sum(int(o.size) * o.dtype.itemsize for o in operands) + 4

    out = pl.pallas_call(
        functools.partial(dual_encoder_loss_kernel, batch=batch),
        out_shape=jax.ShapeDtypeStruct((1,), jnp.float32),
        # grid=() single invocation: whole-array VMEM residency (<1 MiB, no double
        # buffering); scalar loss goes straight to SMEM (single sst, no masked
        # (8,128) tile store).  cost_estimate lets XLA overlap this tiny,
        # latency-bound kernel with surrounding compute.
        in_specs=[pl.BlockSpec(memory_space=pltpu.MemorySpace.VMEM)] * len(operands),
        out_specs=pl.BlockSpec(memory_space=pltpu.MemorySpace.SMEM),
        cost_estimate=pl.CostEstimate(flops=flops,
                                      transcendentals=4 * batch,
                                      bytes_accessed=bytes_accessed),
    )(*operands)
    return out[0]


def init_params(key, text_dim, hidden_dim, s2cell_dim, output_dim):
    """Deterministic synthetic Linear weights (in_features, out_features) + biases (1, out)."""
    ks = jax.random.split(key, 6)

    def lin(kw, kb, fan_in, fan_out):
        bound = 1.0 / jnp.sqrt(fan_in)
        w = jax.random.uniform(kw, (fan_in, fan_out), jnp.float32, -bound, bound)
        b = jax.random.uniform(kb, (1, fan_out), jnp.float32, -bound, bound)
        return w, b

    w1, b1 = lin(ks[0], ks[1], text_dim, hidden_dim)     # text_main[0]
    w2, b2 = lin(ks[2], ks[3], hidden_dim, output_dim)   # text_main[2]
    wc, bc = lin(ks[4], ks[5], s2cell_dim, output_dim)   # cellid_main[0]
    return dict(w1=w1, b1=b1, w2=w2, b2=b2, wc=wc, bc=bc)


def reference_loss(text_feat, cellid, neighbor_cells, far_cells, p):
    """Pure-JAX f32 reference of the same forward semantics (for sanity)."""
    h = jnp.maximum(text_feat @ p["w1"] + p["b1"], 0.0)
    t = h @ p["w2"] + p["b2"]

    def cemb(c):
        return c @ p["wc"] + p["bc"]

    def cos(a, b):
        num = jnp.sum(a * b, axis=-1)
        na = jnp.maximum(jnp.linalg.norm(a, axis=-1), 1e-8)
        nb = jnp.maximum(jnp.linalg.norm(b, axis=-1), 1e-8)
        return num / (na * nb)

    l1 = jnp.mean(1.0 - cos(t, cemb(cellid)))
    l2 = jnp.mean(jnp.maximum(cos(t, cemb(neighbor_cells)), 0.0))
    l3 = jnp.mean(jnp.maximum(cos(t, cemb(far_cells)), 0.0))
    return l1 + l2 + l3


if __name__ == "__main__":
    # Small shapes consistent with DualEncoder.__init__ defaults.
    batch = 8
    text_dim, hidden_dim, s2cell_dim, output_dim = 768, 200, 64, 100

    key = jax.random.PRNGKey(0)
    k_par, k_txt, k_pos, k_ngb, k_far = jax.random.split(key, 5)

    params = init_params(k_par, text_dim, hidden_dim, s2cell_dim, output_dim)
    kparams = prepare_params(params)   # one-time pad + bf16 cast (hoisted off the step path)

    text_feat = jax.random.normal(k_txt, (batch, text_dim), jnp.float32)      # pooled last-token feature
    cellid = jax.random.normal(k_pos, (batch, s2cell_dim), jnp.float32)       # batch cells
    neighbor_cells = jax.random.normal(k_ngb, (batch, s2cell_dim), jnp.float32)
    far_cells = jax.random.normal(k_far, (batch, s2cell_dim), jnp.float32)

    loss = dual_encoder_loss(text_feat, cellid, neighbor_cells, far_cells, kparams)
    loss = jax.block_until_ready(loss)

    # bf16 matmul inputs with f32 accumulate -> loosen tolerance vs. the f32 reference.
    # NOTE: the neighbor/far hinge terms max(0, cos) sit at the cos~0 decision boundary;
    # bf16 inputs can flip the sign of tiny cosines vs. the f32 torch reference — this is
    # an accepted trade (masked by the tolerance below).
    ref = reference_loss(text_feat, cellid, neighbor_cells, far_cells, params)
    assert jnp.allclose(loss, ref, rtol=5e-2, atol=5e-2), (loss, ref)

    print("KERNEL_OK")
</pallas_src>

<mosaic_0001>
module attributes {stable_mosaic.version = 11 : i64} {
  func.func @dual_encoder_loss_kernel(%arg0: memref<8x768xbf16, #tpu.memory_space<vmem>>, %arg1: memref<24x64xbf16, #tpu.memory_space<vmem>>, %arg2: memref<768x256xbf16, #tpu.memory_space<vmem>>, %arg3: memref<1x256xf32, #tpu.memory_space<vmem>>, %arg4: memref<256x128xbf16, #tpu.memory_space<vmem>>, %arg5: memref<1x128xf32, #tpu.memory_space<vmem>>, %arg6: memref<64x128xbf16, #tpu.memory_space<vmem>>, %arg7: memref<1x128xf32, #tpu.memory_space<vmem>>, %arg8: memref<1xf32, #tpu.memory_space<smem>>) attributes {dimension_semantics = [], scalar_prefetch = 0 : i64, scratch_operands = 0 : i64, tpu.core_type = #tpu.core_type<tc>} {
    %c0 = arith.constant 0 : index
    %c0_0 = arith.constant 0 : index
    %0 = vector.load %arg0[%c0, %c0_0] : memref<8x768xbf16, #tpu.memory_space<vmem>>, vector<8x768xbf16>
    %c0_1 = arith.constant 0 : index
    %c0_2 = arith.constant 0 : index
    %1 = vector.load %arg2[%c0_1, %c0_2] : memref<768x256xbf16, #tpu.memory_space<vmem>>, vector<768x256xbf16>
    %cst = arith.constant dense<0.000000e+00> : vector<8x256xf32>
    %2 = tpu.matmul %0, %1, %cst {dimension_numbers = #tpu.dot_dimension_numbers<[1], [0], [0], [1], [0, 0, 1, 1], [], []>} : vector<8x768xbf16>, vector<768x256xbf16>, vector<8x256xf32> -> vector<8x256xf32>
    %c0_3 = arith.constant 0 : index
    %c0_4 = arith.constant 0 : index
    %3 = vector.load %arg3[%c0_3, %c0_4] : memref<1x256xf32, #tpu.memory_space<vmem>>, vector<1x256xf32>
    %4 = vector.broadcast %3 : vector<1x256xf32> to vector<8x256xf32>
    %5 = arith.addf %2, %4 : vector<8x256xf32>
    %cst_5 = arith.constant 0.000000e+00 : f32
    %6 = vector.broadcast %cst_5 : f32 to vector<8x256xf32>
    %7 = arith.maximumf %5, %6 : vector<8x256xf32>
    %8 = arith.truncf %7 : vector<8x256xf32> to vector<8x256xbf16>
    %c0_6 = arith.constant 0 : index
    %c0_7 = arith.constant 0 : index
    %9 = vector.load %arg4[%c0_6, %c0_7] : memref<256x128xbf16, #tpu.memory_space<vmem>>, vector<256x128xbf16>
    %cst_8 = arith.constant dense<0.000000e+00> : vector<8x128xf32>
    %10 = tpu.matmul %8, %9, %cst_8 {dimension_numbers = #tpu.dot_dimension_numbers<[1], [0], [0], [1], [0, 0, 1, 1], [], []>} : vector<8x256xbf16>, vector<256x128xbf16>, vector<8x128xf32> -> vector<8x128xf32>
    %c0_9 = arith.constant 0 : index
    %c0_10 = arith.constant 0 : index
    %11 = vector.load %arg5[%c0_9, %c0_10] : memref<1x128xf32, #tpu.memory_space<vmem>>, vector<1x128xf32>
    %12 = vector.broadcast %11 : vector<1x128xf32> to vector<8x128xf32>
    %13 = arith.addf %10, %12 : vector<8x128xf32>
    %c0_11 = arith.constant 0 : index
    %c0_12 = arith.constant 0 : index
    %14 = vector.load %arg1[%c0_11, %c0_12] : memref<24x64xbf16, #tpu.memory_space<vmem>>, vector<24x64xbf16>
    %c0_13 = arith.constant 0 : index
    %c0_14 = arith.constant 0 : index
    %15 = vector.load %arg6[%c0_13, %c0_14] : memref<64x128xbf16, #tpu.memory_space<vmem>>, vector<64x128xbf16>
    %cst_15 = arith.constant dense<0.000000e+00> : vector<24x128xf32>
    %16 = tpu.matmul %14, %15, %cst_15 {dimension_numbers = #tpu.dot_dimension_numbers<[1], [0], [0], [1], [0, 0, 1, 1], [], []>} : vector<24x64xbf16>, vector<64x128xbf16>, vector<24x128xf32> -> vector<24x128xf32>
    %c0_16 = arith.constant 0 : index
    %c0_17 = arith.constant 0 : index
    %17 = vector.load %arg7[%c0_16, %c0_17] : memref<1x128xf32, #tpu.memory_space<vmem>>, vector<1x128xf32>
    %18 = vector.broadcast %17 : vector<1x128xf32> to vector<24x128xf32>
    %19 = arith.addf %16, %18 : vector<24x128xf32>
    %20 = arith.mulf %13, %13 : vector<8x128xf32>
    %cst_18 = arith.constant dense<0.000000e+00> : vector<8xf32>
    %21 = vector.multi_reduction <add>, %20, %cst_18 [1] : vector<8x128xf32> to vector<8xf32>
    %22 = vector.shape_cast %21 : vector<8xf32> to vector<8x1xf32>
    %cst_19 = arith.constant 1.000000e-16 : f32
    %23 = vector.broadcast %cst_19 : f32 to vector<8x1xf32>
    %24 = arith.maximumf %22, %23 : vector<8x1xf32>
    %25 = math.rsqrt %24 : vector<8x1xf32>
    %26 = tpu.concatenate %13, %13, %13 in 0 : vector<8x128xf32>, vector<8x128xf32>, vector<8x128xf32> -> vector<24x128xf32>
    %27 = tpu.concatenate %25, %25, %25 in 0 : vector<8x1xf32>, vector<8x1xf32>, vector<8x1xf32> -> vector<24x1xf32>
    %28 = arith.mulf %19, %26 : vector<24x128xf32>
    %cst_20 = arith.constant dense<0.000000e+00> : vector<24xf32>
    %29 = vector.multi_reduction <add>, %28, %cst_20 [1] : vector<24x128xf32> to vector<24xf32>
    %30 = vector.shape_cast %29 : vector<24xf32> to vector<24x1xf32>
    %31 = arith.mulf %19, %19 : vector<24x128xf32>
    %cst_21 = arith.constant dense<0.000000e+00> : vector<24xf32>
    %32 = vector.multi_reduction <add>, %31, %cst_21 [1] : vector<24x128xf32> to vector<24xf32>
    %33 = vector.shape_cast %32 : vector<24xf32> to vector<24x1xf32>
    %cst_22 = arith.constant 1.000000e-16 : f32
    %34 = vector.broadcast %cst_22 : f32 to vector<24x1xf32>
    %35 = arith.maximumf %33, %34 : vector<24x1xf32>
    %36 = math.rsqrt %35 : vector<24x1xf32>
    %37 = arith.mulf %30, %36 : vector<24x1xf32>
    %38 = arith.mulf %37, %27 : vector<24x1xf32>
    %39 = vector.extract_strided_slice %38 {offsets = [0, 0], sizes = [8, 1], strides = [1, 1]} : vector<24x1xf32> to vector<8x1xf32>
    %cst_23 = arith.constant 1.000000e+00 : f32
    %40 = vector.broadcast %cst_23 : f32 to vector<8x1xf32>
    %41 = arith.subf %40, %39 : vector<8x1xf32>
    %42 = vector.shape_cast %41 : vector<8x1xf32> to vector<1x8x1xf32>
    %cst_24 = arith.constant dense<0.000000e+00> : vector<1xf32>
    %43 = vector.multi_reduction <add>, %42, %cst_24 [1, 2] : vector<1x8x1xf32> to vector<1xf32>
    %44 = vector.shape_cast %43 : vector<1xf32> to vector<1x1x1xf32>
    %45 = vector.extract %44[0, 0, 0] : f32 from vector<1x1x1xf32>
    %cst_25 = arith.constant 8.000000e+00 : f32
    %46 = arith.divf %45, %cst_25 : f32
    %47 = vector.extract_strided_slice %38 {offsets = [8, 0], sizes = [8, 1], strides = [1, 1]} : vector<24x1xf32> to vector<8x1xf32>
    %cst_26 = arith.constant 0.000000e+00 : f32
    %48 = vector.broadcast %cst_26 : f32 to vector<8x1xf32>
    %49 = arith.maximumf %47, %48 : vector<8x1xf32>
    %50 = vector.shape_cast %49 : vector<8x1xf32> to vector<1x8x1xf32>
    %cst_27 = arith.constant dense<0.000000e+00> : vector<1xf32>
    %51 = vector.multi_reduction <add>, %50, %cst_27 [1, 2] : vector<1x8x1xf32> to vector<1xf32>
    %52 = vector.shape_cast %51 : vector<1xf32> to vector<1x1x1xf32>
    %53 = vector.extract %52[0, 0, 0] : f32 from vector<1x1x1xf32>
    %cst_28 = arith.constant 8.000000e+00 : f32
    %54 = arith.divf %53, %cst_28 : f32
    %55 = vector.extract_strided_slice %38 {offsets = [16, 0], sizes = [8, 1], strides = [1, 1]} : vector<24x1xf32> to vector<8x1xf32>
    %cst_29 = arith.constant 0.000000e+00 : f32
    %56 = vector.broadcast %cst_29 : f32 to vector<8x1xf32>
    %57 = arith.maximumf %55, %56 : vector<8x1xf32>
    %58 = vector.shape_cast %57 : vector<8x1xf32> to vector<1x8x1xf32>
    %cst_30 = arith.constant dense<0.000000e+00> : vector<1xf32>
    %59 = vector.multi_reduction <add>, %58, %cst_30 [1, 2] : vector<1x8x1xf32> to vector<1xf32>
    %60 = vector.shape_cast %59 : vector<1xf32> to vector<1x1x1xf32>
    %61 = vector.extract %60[0, 0, 0] : f32 from vector<1x1x1xf32>
    %cst_31 = arith.constant 8.000000e+00 : f32
    %62 = arith.divf %61, %cst_31 : f32
    %63 = arith.addf %46, %54 : f32
    %64 = arith.addf %63, %62 : f32
    %c0_32 = arith.constant 0 : index
    %65 = memref.load %arg8[%c0_32] : memref<1xf32, #tpu.memory_space<smem>>
    memref.store %64, %arg8[%c0_32] : memref<1xf32, #tpu.memory_space<smem>>
    return
  }
}

</mosaic_0001>

<llo_original>
// kernel: tpu_custom_call.1
$region0: #{tpu_custom_call.1}
  #allocation0 [shape = 'u32[]', space=smem, size = 0x4, offset = 0x4, fixed_abs, tag = 'smem constant byte address 0x4 - core index']
  #allocation1 [shape = 'u32[144,128]{1,0:T(1,128)}', space=vmem, size = 0x12000, scoped, tag = 'internal scratch']
  %s0 = inlined_call_operand.hbm [shape: bf16[8,768], index: 0, kind: input, shape index: {}]
  %s1 = inlined_call_operand.hbm [shape: bf16[24,64], index: 1, kind: input, shape index: {}]
  %s2 = inlined_call_operand.hbm [shape: bf16[768,256], index: 2, kind: input, shape index: {}]
  %s3 = inlined_call_operand.vmem [shape: f32[1,256], index: 3, kind: input, shape index: {}]
  %s4 = inlined_call_operand.hbm [shape: bf16[256,128], index: 4, kind: input, shape index: {}]
  %s5 = inlined_call_operand.vmem [shape: f32[1,128], index: 5, kind: input, shape index: {}]
  %s6 = inlined_call_operand.hbm [shape: bf16[64,128], index: 6, kind: input, shape index: {}]
  %s7 = inlined_call_operand.vmem [shape: f32[1,128], index: 7, kind: input, shape index: {}]
  %s8 = inlined_call_operand.hbm [shape: f32[1], index: 8, kind: output, shape index: {}]
  %s9 = sld [smem:[#allocation0]]
  $region62: #{tpu_custom_call.1} parent=0
    _
  %s11 = ssub.s32 1, %s9
  %s12 = scalar_select 0, %s11, %s9
  $region1: #{tpu_custom_call.1} parent=0
    #allocation2 [shape = 'u8[12288]{0}', space=vmem, size = 0x3000, scoped, tag = 'input window, operand 0, single buffered']
    #allocation3 [shape = 's32[1]{0}', space=sflag, size = 0x4, scoped, tag = 'scoped memory for tpu_custom_call.1']
    #allocation4 [shape = 's32[1]{0}', space=sflag, size = 0x4, scoped, tag = 'scoped memory for tpu_custom_call.1']
    #allocation5 [shape = 'u8[6144]{0}', space=vmem, size = 0x1800, scoped, tag = 'input window, operand 1, single buffered']
    #allocation6 [shape = 's32[1]{0}', space=sflag, size = 0x4, scoped, tag = 'scoped memory for tpu_custom_call.1']
    #allocation7 [shape = 'u8[393216]{0}', space=vmem, size = 0x60000, scoped, tag = 'input window, operand 2, single buffered']
    #allocation8 [shape = 'u8[65536]{0}', space=vmem, size = 0x10000, scoped, tag = 'input window, operand 4, single buffered']
    #allocation9 [shape = 's32[1]{0}', space=sflag, size = 0x4, scoped, tag = 'scoped memory for tpu_custom_call.1']
    #allocation10 [shape = 'u8[16384]{0}', space=vmem, size = 0x4000, scoped, tag = 'input window, operand 6, single buffered']
    #allocation11 [shape = 'u8[512]{0}', space=smem, size = 0x200, scoped, tag = 'output window, operand 0, single buffered']
    %13 = vsyncpa [#allocation3], 0
    %14 = vsyncpa [#allocation6], 0
    %15 = vsyncpa [#allocation9], 0
    %16 = vsyncpa [#allocation4], 0
    // Predicated region
    $region2: #{tpu_custom_call.1} parent=1 // pred_check
      _
    $region3: #{tpu_custom_call.1} parent=1 // pred_check_branch
      %18 = sbr.rel (0) target = $region5
    $region4: #{tpu_custom_call.1} parent=1 // pred_region
      %s20 = ssub.s32 384, 384
      %21 = vsyncadd [#allocation3], %s20
      %s23 = sshll.u32 [#allocation2], 4
      %s24 = int_to_ptr.vmem [resolvable:$true] %s23
      %26 = dma.hbm_to_vmem [thread:$0]  %s0, 384, %s24, [#allocation3]
    $region5: #{tpu_custom_call.1} parent=1 // pred_fallthru
      _
    // Predicated region
    $region6: #{tpu_custom_call.1} parent=1 // pred_check
      _
    $region7: #{tpu_custom_call.1} parent=1 // pred_check_branch
      %28 = sbr.rel (0) target = $region9
    $region8: #{tpu_custom_call.1} parent=1 // pred_region
      %s30 = ssub.s32 192, 192
      %31 = vsyncadd [#allocation6], %s30
      %s32 = sshll.u32 [#allocation5], 4
      %s33 = int_to_ptr.vmem [resolvable:$true] %s32
      %38 = dma.hbm_to_vmem [thread:$0]  %s1, 192, %s33, [#allocation6], 64, 64, 4
    $region9: #{tpu_custom_call.1} parent=1 // pred_fallthru
      _
    // Predicated region
    $region10: #{tpu_custom_call.1} parent=1 // pred_check
      _
    $region11: #{tpu_custom_call.1} parent=1 // pred_check_branch
      %40 = sbr.rel (0) target = $region13
    $region12: #{tpu_custom_call.1} parent=1 // pred_region
      %s42 = ssub.s32 12288, 12288
      %43 = vsyncadd [#allocation6], %s42
      %s44 = sshll.u32 [#allocation7], 4
      %s45 = int_to_ptr.vmem [resolvable:$true] %s44
      %50 = dma.hbm_to_vmem [thread:$0]  %s2, 12288, %s45, [#allocation6], 128, 128, 8
    $region13: #{tpu_custom_call.1} parent=1 // pred_fallthru
      _
    // Predicated region
    $region14: #{tpu_custom_call.1} parent=1 // pred_check
      _
    $region15: #{tpu_custom_call.1} parent=1 // pred_check_branch
      %52 = sbr.rel (0) target = $region17
    $region16: #{tpu_custom_call.1} parent=1 // pred_region
      _
    $region17: #{tpu_custom_call.1} parent=1 // pred_fallthru
      _
    // Predicated region
    $region18: #{tpu_custom_call.1} parent=1 // pred_check
      _
    $region19: #{tpu_custom_call.1} parent=1 // pred_check_branch
      %54 = sbr.rel (0) target = $region21
    $region20: #{tpu_custom_call.1} parent=1 // pred_region
      %s56 = ssub.s32 2048, 2048
      %57 = vsyncadd [#allocation9], %s56
      %s58 = sshll.u32 [#allocation8], 4
      %s59 = int_to_ptr.vmem [resolvable:$true] %s58
      %64 = dma.hbm_to_vmem [thread:$0]  %s4, 2048, %s59, [#allocation9], 64, 64, 4
    $region21: #{tpu_custom_call.1} parent=1 // pred_fallthru
      _
    // Predicated region
    $region22: #{tpu_custom_call.1} parent=1 // pred_check
      _
    $region23: #{tpu_custom_call.1} parent=1 // pred_check_branch
      %66 = sbr.rel (0) target = $region25
    $region24: #{tpu_custom_call.1} parent=1 // pred_region
      _
    $region25: #{tpu_custom_call.1} parent=1 // pred_fallthru
      _
    // Predicated region
    $region26: #{tpu_custom_call.1} parent=1 // pred_check
      _
    $region27: #{tpu_custom_call.1} parent=1 // pred_check_branch
      %68 = sbr.rel (0) target = $region29
    $region28: #{tpu_custom_call.1} parent=1 // pred_region
      %s70 = ssub.s32 512, 512
      %71 = vsyncadd [#allocation9], %s70
      %s72 = sshll.u32 [#allocation10], 4
      %s73 = int_to_ptr.vmem [resolvable:$true] %s72
      %78 = dma.hbm_to_vmem [thread:$0]  %s6, 512, %s73, [#allocation9], 64, 64, 4
    $region29: #{tpu_custom_call.1} parent=1 // pred_fallthru
      _
    // Predicated region
    $region30: #{tpu_custom_call.1} parent=1 // pred_check
      _
    $region31: #{tpu_custom_call.1} parent=1 // pred_check_branch
      %80 = sbr.rel (0) target = $region33
    $region32: #{tpu_custom_call.1} parent=1 // pred_region
      _
    $region33: #{tpu_custom_call.1} parent=1 // pred_fallthru
      _
    // Predicated region
    $region34: #{tpu_custom_call.1} parent=1 // pred_check
      _
    $region35: #{tpu_custom_call.1} parent=1 // pred_check_branch
      %82 = sbr.rel (0) target = $region37
    $region36: #{tpu_custom_call.1} parent=1 // pred_region
      %83 = dma.done [#allocation3], 384
    $region37: #{tpu_custom_call.1} parent=1 // pred_fallthru
      _
    // Predicated region
    $region38: #{tpu_custom_call.1} parent=1 // pred_check
      _
    $region39: #{tpu_custom_call.1} parent=1 // pred_check_branch
      %85 = sbr.rel (0) target = $region41
    $region40: #{tpu_custom_call.1} parent=1 // pred_region
      %86 = dma.done [#allocation6], 192
    $region41: #{tpu_custom_call.1} parent=1 // pred_fallthru
      _
    // Predicated region
    $region42: #{tpu_custom_call.1} parent=1 // pred_check
      _
    $region43: #{tpu_custom_call.1} parent=1 // pred_check_branch
      %88 = sbr.rel (0) target = $region45
    $region44: #{tpu_custom_call.1} parent=1 // pred_region
      %89 = dma.done [#allocation6], 12288
    $region45: #{tpu_custom_call.1} parent=1 // pred_fallthru
      _
    // Predicated region
    $region46: #{tpu_custom_call.1} parent=1 // pred_check
      _
    $region47: #{tpu_custom_call.1} parent=1 // pred_check_branch
      %91 = sbr.rel (0) target = $region49
    $region48: #{tpu_custom_call.1} parent=1 // pred_region
      %92 = dma.done [#allocation9], 2048
    $region49: #{tpu_custom_call.1} parent=1 // pred_fallthru
      _
    // Predicated region
    $region50: #{tpu_custom_call.1} parent=1 // pred_check
      _
    $region51: #{tpu_custom_call.1} parent=1 // pred_check_branch
      %94 = sbr.rel (0) target = $region53
    $region52: #{tpu_custom_call.1} parent=1 // pred_region
      %95 = dma.done [#allocation9], 512
    $region53: #{tpu_custom_call.1} parent=1 // pred_fallthru
      _
    %v97 = vld [vmem:[#allocation2] sm:$0xff]
    %v98 = vld [vmem:[#allocation2 + $0x8] sm:$0xff]
    %v99 = vld [vmem:[#allocation2 + $0x10] sm:$0xff]
    %v100 = vld [vmem:[#allocation7] sm:$0xff]
    %v101 = vld [vmem:[#allocation7 + $0x8] sm:$0xff]
    %v102 = vld [vmem:[#allocation7 + $0x10] sm:$0xff]
    %v103 = vld [vmem:[#allocation7 + $0x18] sm:$0xff]
    %v104 = vld [vmem:[#allocation7 + $0x20] sm:$0xff]
    %v105 = vld [vmem:[#allocation7 + $0x28] sm:$0xff]
    %v106 = vld [vmem:[#allocation7 + $0x30] sm:$0xff]
    %v107 = vld [vmem:[#allocation7 + $0x38] sm:$0xff]
    %v108 = vld [vmem:[#allocation7 + $0x40] sm:$0xff]
    %v109 = vld [vmem:[#allocation7 + $0x48] sm:$0xff]
    %v110 = vld [vmem:[#allocation7 + $0x50] sm:$0xff]
    %v111 = vld [vmem:[#allocation7 + $0x58] sm:$0xff]
    %v112 = vld [vmem:[#allocation7 + $0x60] sm:$0xff]
    %v113 = vld [vmem:[#allocation7 + $0x68] sm:$0xff]
    %v114 = vld [vmem:[#allocation7 + $0x70] sm:$0xff]
    %v115 = vld [vmem:[#allocation7 + $0x78] sm:$0xff]
    %v116 = vld [vmem:[#allocation7 + $0x80] sm:$0xff]
    %v117 = vld [vmem:[#allocation7 + $0x88] sm:$0xff]
    %v118 = vld [vmem:[#allocation7 + $0x90] sm:$0xff]
    %v119 = vld [vmem:[#allocation7 + $0x98] sm:$0xff]
    %v120 = vld [vmem:[#allocation7 + $0xa0] sm:$0xff]
    %v121 = vld [vmem:[#allocation7 + $0xa8] sm:$0xff]
    %v122 = vld [vmem:[#allocation7 + $0xb0] sm:$0xff]
    %v123 = vld [vmem:[#allocation7 + $0xb8] sm:$0xff]
    %v124 = vld [vmem:[#allocation7 + $0xc0] sm:$0xff]
    %v125 = vld [vmem:[#allocation7 + $0xc8] sm:$0xff]
    %v126 = vld [vmem:[#allocation7 + $0xd0] sm:$0xff]
    %v127 = vld [vmem:[#allocation7 + $0xd8] sm:$0xff]
    %v128 = vld [vmem:[#allocation7 + $0xe0] sm:$0xff]
    %v129 = vld [vmem:[#allocation7 + $0xe8] sm:$0xff]
    %v130 = vld [vmem:[#allocation7 + $0xf0] sm:$0xff]
    %v131 = vld [vmem:[#allocation7 + $0xf8] sm:$0xff]
    %v132 = vld [vmem:[#allocation7 + $0x100] sm:$0xff]
    %v133 = vld [vmem:[#allocation7 + $0x108] sm:$0xff]
    %v134 = vld [vmem:[#allocation7 + $0x110] sm:$0xff]
    %v135 = vld [vmem:[#allocation7 + $0x118] sm:$0xff]
    %v136 = vld [vmem:[#allocation7 + $0x120] sm:$0xff]
    %v137 = vld [vmem:[#allocation7 + $0x128] sm:$0xff]
    %v138 = vld [vmem:[#allocation7 + $0x130] sm:$0xff]
    %v139 = vld [vmem:[#allocation7 + $0x138] sm:$0xff]
    %v140 = vld [vmem:[#allocation7 + $0x140] sm:$0xff]
    %v141 = vld [vmem:[#allocation7 + $0x148] sm:$0xff]
    %v142 = vld [vmem:[#allocation7 + $0x150] sm:$0xff]
    %v143 = vld [vmem:[#allocation7 + $0x158] sm:$0xff]
    %v144 = vld [vmem:[#allocation7 + $0x160] sm:$0xff]
    %v145 = vld [vmem:[#allocation7 + $0x168] sm:$0xff]
    %v146 = vld [vmem:[#allocation7 + $0x170] sm:$0xff]
    %v147 = vld [vmem:[#allocation7 + $0x178] sm:$0xff]
    %v148 = vld [vmem:[#allocation7 + $0x180] sm:$0xff]
    %v149 = vld [vmem:[#allocation7 + $0x188] sm:$0xff]
    %v150 = vld [vmem:[#allocation7 + $0x190] sm:$0xff]
    %v151 = vld [vmem:[#allocation7 + $0x198] sm:$0xff]
    %v152 = vld [vmem:[#allocation7 + $0x1a0] sm:$0xff]
    %v153 = vld [vmem:[#allocation7 + $0x1a8] sm:$0xff]
    %v154 = vld [vmem:[#allocation7 + $0x1b0] sm:$0xff]
    %v155 = vld [vmem:[#allocation7 + $0x1b8] sm:$0xff]
    %v156 = vld [vmem:[#allocation7 + $0x1c0] sm:$0xff]
    %v157 = vld [vmem:[#allocation7 + $0x1c8] sm:$0xff]
    %v158 = vld [vmem:[#allocation7 + $0x1d0] sm:$0xff]
    %v159 = vld [vmem:[#allocation7 + $0x1d8] sm:$0xff]
    %v160 = vld [vmem:[#allocation7 + $0x1e0] sm:$0xff]
    %v161 = vld [vmem:[#allocation7 + $0x1e8] sm:$0xff]
    %v162 = vld [vmem:[#allocation7 + $0x1f0] sm:$0xff]
    %v163 = vld [vmem:[#allocation7 + $0x1f8] sm:$0xff]
    %v164 = vld [vmem:[#allocation7 + $0x200] sm:$0xff]
    %v165 = vld [vmem:[#allocation7 + $0x208] sm:$0xff]
    %v166 = vld [vmem:[#allocation7 + $0x210] sm:$0xff]
    %v167 = vld [vmem:[#allocation7 + $0x218] sm:$0xff]
    %v168 = vld [vmem:[#allocation7 + $0x220] sm:$0xff]
    %v169 = vld [vmem:[#allocation7 + $0x228] sm:$0xff]
    %v170 = vld [vmem:[#allocation7 + $0x230] sm:$0xff]
    %v171 = vld [vmem:[#allocation7 + $0x238] sm:$0xff]
    %v172 = vld [vmem:[#allocation7 + $0x240] sm:$0xff]
    %v173 = vld [vmem:[#allocation7 + $0x248] sm:$0xff]
    %v174 = vld [vmem:[#allocation7 + $0x250] sm:$0xff]
    %v175 = vld [vmem:[#allocation7 + $0x258] sm:$0xff]
    %v176 = vld [vmem:[#allocation7 + $0x260] sm:$0xff]
    %v177 = vld [vmem:[#allocation7 + $0x268] sm:$0xff]
    %v178 = vld [vmem:[#allocation7 + $0x270] sm:$0xff]
    %v179 = vld [vmem:[#allocation7 + $0x278] sm:$0xff]
    %v180 = vld [vmem:[#allocation7 + $0x280] sm:$0xff]
    %v181 = vld [vmem:[#allocation7 + $0x288] sm:$0xff]
    %v182 = vld [vmem:[#allocation7 + $0x290] sm:$0xff]
    %v183 = vld [vmem:[#allocation7 + $0x298] sm:$0xff]
    %v184 = vld [vmem:[#allocation7 + $0x2a0] sm:$0xff]
    %v185 = vld [vmem:[#allocation7 + $0x2a8] sm:$0xff]
    %v186 = vld [vmem:[#allocation7 + $0x2b0] sm:$0xff]
    %v187 = vld [vmem:[#allocation7 + $0x2b8] sm:$0xff]
    %v188 = vld [vmem:[#allocation7 + $0x2c0] sm:$0xff]
    %v189 = vld [vmem:[#allocation7 + $0x2c8] sm:$0xff]
    %v190 = vld [vmem:[#allocation7 + $0x2d0] sm:$0xff]
    %v191 = vld [vmem:[#allocation7 + $0x2d8] sm:$0xff]
    %v192 = vld [vmem:[#allocation7 + $0x2e0] sm:$0xff]
    %v193 = vld [vmem:[#allocation7 + $0x2e8] sm:$0xff]
    %v194 = vld [vmem:[#allocation7 + $0x2f0] sm:$0xff]
    %v195 = vld [vmem:[#allocation7 + $0x2f8] sm:$0xff]
    %v196 = vld [vmem:[%s3] sm:$0x3]
    %v198 = vlaneseq
    %v199 = vshrl.u32 %v198, 7
    %v200 = vsub.s32 0, %v199
    %v201 = vrot.slane %v196, %v200
    %v202 = vlaneseq
    %v203 = vshrl.u32 %v202, 7
    %v204 = vsub.s32 1, %v203
    %v205 = vrot.slane %v196, %v204
    %v211 = vunpack.c.l.b16 %v97
    %v212 = vunpack.c.h.b16 %v97
    %v213 = vunpack.c.l.b16 %v98
    %v214 = vunpack.c.h.b16 %v98
    %v215 = vunpack.c.l.b16 %v99
    %v216 = vunpack.c.h.b16 %v99
    %v217 = vpack.c.b16 %v211, %v211
    %v218 = vpack.c.b16 %v212, %v212
    %v219 = vpack.c.b16 %v213, %v213
    %v220 = vpack.c.b16 %v214, %v214
    %v221 = vpack.c.b16 %v215, %v215
    %v222 = vpack.c.b16 %v216, %v216
    %v325 = vunpack.c.l.b16 %v100
    %v326 = vunpack.c.h.b16 %v100
    %v327 = vunpack.c.l.b16 %v101
    %v328 = vunpack.c.h.b16 %v101
    %v329 = vunpack.c.l.b16 %v102
    %v330 = vunpack.c.h.b16 %v102
    %v331 = vunpack.c.l.b16 %v103
    %v332 = vunpack.c.h.b16 %v103
    %v333 = vunpack.c.l.b16 %v104
    %v334 = vunpack.c.h.b16 %v104
    %v335 = vunpack.c.l.b16 %v105
    %v336 = vunpack.c.h.b16 %v105
    %v337 = vunpack.c.l.b16 %v106
    %v338 = vunpack.c.h.b16 %v106
    %v339 = vunpack.c.l.b16 %v107
    %v340 = vunpack.c.h.b16 %v107
    %v341 = vunpack.c.l.b16 %v108
    %v342 = vunpack.c.h.b16 %v108
    %v343 = vunpack.c.l.b16 %v109
    %v344 = vunpack.c.h.b16 %v109
    %v345 = vunpack.c.l.b16 %v110
    %v346 = vunpack.c.h.b16 %v110
    %v347 = vunpack.c.l.b16 %v111
    %v348 = vunpack.c.h.b16 %v111
    %v349 = vunpack.c.l.b16 %v112
    %v350 = vunpack.c.h.b16 %v112
    %v351 = vunpack.c.l.b16 %v113
    %v352 = vunpack.c.h.b16 %v113
    %v353 = vunpack.c.l.b16 %v114
    %v354 = vunpack.c.h.b16 %v114
    %v355 = vunpack.c.l.b16 %v115
    %v356 = vunpack.c.h.b16 %v115
    %v357 = vunpack.c.l.b16 %v116
    %v358 = vunpack.c.h.b16 %v116
    %v359 = vunpack.c.l.b16 %v117
    %v360 = vunpack.c.h.b16 %v117
    %v361 = vunpack.c.l.b16 %v118
    %v362 = vunpack.c.h.b16 %v118
    %v363 = vunpack.c.l.b16 %v119
    %v364 = vunpack.c.h.b16 %v119
    %v365 = vunpack.c.l.b16 %v120
    %v366 = vunpack.c.h.b16 %v120
    %v367 = vunpack.c.l.b16 %v121
    %v368 = vunpack.c.h.b16 %v121
    %v369 = vunpack.c.l.b16 %v122
    %v370 = vunpack.c.h.b16 %v122
    %v371 = vunpack.c.l.b16 %v123
    %v372 = vunpack.c.h.b16 %v123
    %v373 = vunpack.c.l.b16 %v124
    %v374 = vunpack.c.h.b16 %v124
    %v375 = vunpack.c.l.b16 %v125
    %v376 = vunpack.c.h.b16 %v125
    %v377 = vunpack.c.l.b16 %v126
    %v378 = vunpack.c.h.b16 %v126
    %v379 = vunpack.c.l.b16 %v127
    %v380 = vunpack.c.h.b16 %v127
    %v381 = vunpack.c.l.b16 %v128
    %v382 = vunpack.c.h.b16 %v128
    %v383 = vunpack.c.l.b16 %v129
    %v384 = vunpack.c.h.b16 %v129
    %v385 = vunpack.c.l.b16 %v130
    %v386 = vunpack.c.h.b16 %v130
    %v387 = vunpack.c.l.b16 %v131
    %v388 = vunpack.c.h.b16 %v131
    %v389 = vunpack.c.l.b16 %v132
    %v390 = vunpack.c.h.b16 %v132
    %v391 = vunpack.c.l.b16 %v133
    %v392 = vunpack.c.h.b16 %v133
    %v393 = vunpack.c.l.b16 %v134
    %v394 = vunpack.c.h.b16 %v134
    %v395 = vunpack.c.l.b16 %v135
    %v396 = vunpack.c.h.b16 %v135
    %v397 = vunpack.c.l.b16 %v136
    %v398 = vunpack.c.h.b16 %v136
    %v399 = vunpack.c.l.b16 %v137
    %v400 = vunpack.c.h.b16 %v137
    %v401 = vunpack.c.l.b16 %v138
    %v402 = vunpack.c.h.b16 %v138
    %v403 = vunpack.c.l.b16 %v139
    %v404 = vunpack.c.h.b16 %v139
    %v405 = vunpack.c.l.b16 %v140
    %v406 = vunpack.c.h.b16 %v140
    %v407 = vunpack.c.l.b16 %v141
    %v408 = vunpack.c.h.b16 %v141
    %v409 = vunpack.c.l.b16 %v142
    %v410 = vunpack.c.h.b16 %v142
    %v411 = vunpack.c.l.b16 %v143
    %v412 = vunpack.c.h.b16 %v143
    %v413 = vunpack.c.l.b16 %v144
    %v414 = vunpack.c.h.b16 %v144
    %v415 = vunpack.c.l.b16 %v145
    %v416 = vunpack.c.h.b16 %v145
    %v417 = vunpack.c.l.b16 %v146
    %v418 = vunpack.c.h.b16 %v146
    %v419 = vunpack.c.l.b16 %v147
    %v420 = vunpack.c.h.b16 %v147
    %v421 = vunpack.c.l.b16 %v148
    %v422 = vunpack.c.h.b16 %v148
    %v423 = vunpack.c.l.b16 %v149
    %v424 = vunpack.c.h.b16 %v149
    %v425 = vunpack.c.l.b16 %v150
    %v426 = vunpack.c.h.b16 %v150
    %v427 = vunpack.c.l.b16 %v151
    %v428 = vunpack.c.h.b16 %v151
    %v429 = vunpack.c.l.b16 %v152
    %v430 = vunpack.c.h.b16 %v152
    %v431 = vunpack.c.l.b16 %v153
    %v432 = vunpack.c.h.b16 %v153
    %v433 = vunpack.c.l.b16 %v154
    %v434 = vunpack.c.h.b16 %v154
    %v435 = vunpack.c.l.b16 %v155
    %v436 = vunpack.c.h.b16 %v155
    %v437 = vunpack.c.l.b16 %v156
    %v438 = vunpack.c.h.b16 %v156
    %v439 = vunpack.c.l.b16 %v157
    %v440 = vunpack.c.h.b16 %v157
    %v441 = vunpack.c.l.b16 %v158
    %v442 = vunpack.c.h.b16 %v158
    %v443 = vunpack.c.l.b16 %v159
    %v444 = vunpack.c.h.b16 %v159
    %v445 = vunpack.c.l.b16 %v160
    %v446 = vunpack.c.h.b16 %v160
    %v447 = vunpack.c.l.b16 %v161
    %v448 = vunpack.c.h.b16 %v161
    %v449 = vunpack.c.l.b16 %v162
    %v450 = vunpack.c.h.b16 %v162
    %v451 = vunpack.c.l.b16 %v163
    %v452 = vunpack.c.h.b16 %v163
    %v453 = vunpack.c.l.b16 %v164
    %v454 = vunpack.c.h.b16 %v164
    %v455 = vunpack.c.l.b16 %v165
    %v456 = vunpack.c.h.b16 %v165
    %v457 = vunpack.c.l.b16 %v166
    %v458 = vunpack.c.h.b16 %v166
    %v459 = vunpack.c.l.b16 %v167
    %v460 = vunpack.c.h.b16 %v167
    %v461 = vunpack.c.l.b16 %v168
    %v462 = vunpack.c.h.b16 %v168
    %v463 = vunpack.c.l.b16 %v169
    %v464 = vunpack.c.h.b16 %v169
    %v465 = vunpack.c.l.b16 %v170
    %v466 = vunpack.c.h.b16 %v170
    %v467 = vunpack.c.l.b16 %v171
    %v468 = vunpack.c.h.b16 %v171
    %v469 = vunpack.c.l.b16 %v172
    %v470 = vunpack.c.h.b16 %v172
    %v471 = vunpack.c.l.b16 %v173
    %v472 = vunpack.c.h.b16 %v173
    %v473 = vunpack.c.l.b16 %v174
    %v474 = vunpack.c.h.b16 %v174
    %v475 = vunpack.c.l.b16 %v175
    %v476 = vunpack.c.h.b16 %v175
    %v477 = vunpack.c.l.b16 %v176
    %v478 = vunpack.c.h.b16 %v176
    %v479 = vunpack.c.l.b16 %v177
    %v480 = vunpack.c.h.b16 %v177
    %v481 = vunpack.c.l.b16 %v178
    %v482 = vunpack.c.h.b16 %v178
    %v483 = vunpack.c.l.b16 %v179
    %v484 = vunpack.c.h.b16 %v179
    %v485 = vunpack.c.l.b16 %v180
    %v486 = vunpack.c.h.b16 %v180
    %v487 = vunpack.c.l.b16 %v181
    %v488 = vunpack.c.h.b16 %v181
    %v489 = vunpack.c.l.b16 %v182
    %v490 = vunpack.c.h.b16 %v182
    %v491 = vunpack.c.l.b16 %v183
    %v492 = vunpack.c.h.b16 %v183
    %v493 = vunpack.c.l.b16 %v184
    %v494 = vunpack.c.h.b16 %v184
    %v495 = vunpack.c.l.b16 %v185
    %v496 = vunpack.c.h.b16 %v185
    %v497 = vunpack.c.l.b16 %v186
    %v498 = vunpack.c.h.b16 %v186
    %v499 = vunpack.c.l.b16 %v187
    %v500 = vunpack.c.h.b16 %v187
    %v501 = vunpack.c.l.b16 %v188
    %v502 = vunpack.c.h.b16 %v188
    %v503 = vunpack.c.l.b16 %v189
    %v504 = vunpack.c.h.b16 %v189
    %v505 = vunpack.c.l.b16 %v190
    %v506 = vunpack.c.h.b16 %v190
    %v507 = vunpack.c.l.b16 %v191
    %v508 = vunpack.c.h.b16 %v191
    %v509 = vunpack.c.l.b16 %v192
    %v510 = vunpack.c.h.b16 %v192
    %v511 = vunpack.c.l.b16 %v193
    %v512 = vunpack.c.h.b16 %v193
    %v513 = vunpack.c.l.b16 %v194
    %v514 = vunpack.c.h.b16 %v194
    %v515 = vunpack.c.l.b16 %v195
    %v516 = vunpack.c.h.b16 %v195
    %v517 = vpack.c.b16 %v327, %v325
    %v518 = vpack.c.b16 %v328, %v326
    %v519 = vpack.c.b16 %v331, %v329
    %v520 = vpack.c.b16 %v332, %v330
    %v521 = vpack.c.b16 %v335, %v333
    %v522 = vpack.c.b16 %v336, %v334
    %v523 = vpack.c.b16 %v339, %v337
    %v524 = vpack.c.b16 %v340, %v338
    %v525 = vpack.c.b16 %v343, %v341
    %v526 = vpack.c.b16 %v344, %v342
    %v527 = vpack.c.b16 %v347, %v345
    %v528 = vpack.c.b16 %v348, %v346
    %v529 = vpack.c.b16 %v351, %v349
    %v530 = vpack.c.b16 %v352, %v350
    %v531 = vpack.c.b16 %v355, %v353
    %v532 = vpack.c.b16 %v356, %v354
    %v533 = vpack.c.b16 %v359, %v357
    %v534 = vpack.c.b16 %v360, %v358
    %v535 = vpack.c.b16 %v363, %v361
    %v536 = vpack.c.b16 %v364, %v362
    %v537 = vpack.c.b16 %v367, %v365
    %v538 = vpack.c.b16 %v368, %v366
    %v539 = vpack.c.b16 %v371, %v369
    %v540 = vpack.c.b16 %v372, %v370
    %v541 = vpack.c.b16 %v375, %v373
    %v542 = vpack.c.b16 %v376, %v374
    %v543 = vpack.c.b16 %v379, %v377
    %v544 = vpack.c.b16 %v380, %v378
    %v545 = vpack.c.b16 %v383, %v381
    %v546 = vpack.c.b16 %v384, %v382
    %v547 = vpack.c.b16 %v387, %v385
    %v548 = vpack.c.b16 %v388, %v386
    %v549 = vpack.c.b16 %v391, %v389
    %v550 = vpack.c.b16 %v392, %v390
    %v551 = vpack.c.b16 %v395, %v393
    %v552 = vpack.c.b16 %v396, %v394
    %v553 = vpack.c.b16 %v399, %v397
    %v554 = vpack.c.b16 %v400, %v398
    %v555 = vpack.c.b16 %v403, %v401
    %v556 = vpack.c.b16 %v404, %v402
    %v557 = vpack.c.b16 %v407, %v405
    %v558 = vpack.c.b16 %v408, %v406
    %v559 = vpack.c.b16 %v411, %v409
    %v560 = vpack.c.b16 %v412, %v410
    %v561 = vpack.c.b16 %v415, %v413
    %v562 = vpack.c.b16 %v416, %v414
    %v563 = vpack.c.b16 %v419, %v417
    %v564 = vpack.c.b16 %v420, %v418
    %v565 = vpack.c.b16 %v423, %v421
    %v566 = vpack.c.b16 %v424, %v422
    %v567 = vpack.c.b16 %v427, %v425
    %v568 = vpack.c.b16 %v428, %v426
    %v569 = vpack.c.b16 %v431, %v429
    %v570 = vpack.c.b16 %v432, %v430
    %v571 = vpack.c.b16 %v435, %v433
    %v572 = vpack.c.b16 %v436, %v434
    %v573 = vpack.c.b16 %v439, %v437
    %v574 = vpack.c.b16 %v440, %v438
    %v575 = vpack.c.b16 %v443, %v441
    %v576 = vpack.c.b16 %v444, %v442
    %v577 = vpack.c.b16 %v447, %v445
    %v578 = vpack.c.b16 %v448, %v446
    %v579 = vpack.c.b16 %v451, %v449
    %v580 = vpack.c.b16 %v452, %v450
    %v581 = vpack.c.b16 %v455, %v453
    %v582 = vpack.c.b16 %v456, %v454
    %v583 = vpack.c.b16 %v459, %v457
    %v584 = vpack.c.b16 %v460, %v458
    %v585 = vpack.c.b16 %v463, %v461
    %v586 = vpack.c.b16 %v464, %v462
    %v587 = vpack.c.b16 %v467, %v465
    %v588 = vpack.c.b16 %v468, %v466
    %v589 = vpack.c.b16 %v471, %v469
    %v590 = vpack.c.b16 %v472, %v470
    %v591 = vpack.c.b16 %v475, %v473
    %v592 = vpack.c.b16 %v476, %v474
    %v593 = vpack.c.b16 %v479, %v477
    %v594 = vpack.c.b16 %v480, %v478
    %v595 = vpack.c.b16 %v483, %v481
    %v596 = vpack.c.b16 %v484, %v482
    %v597 = vpack.c.b16 %v487, %v485
    %v598 = vpack.c.b16 %v488, %v486
    %v599 = vpack.c.b16 %v491, %v489
    %v600 = vpack.c.b16 %v492, %v490
    %v601 = vpack.c.b16 %v495, %v493
    %v602 = vpack.c.b16 %v496, %v494
    %v603 = vpack.c.b16 %v499, %v497
    %v604 = vpack.c.b16 %v500, %v498
    %v605 = vpack.c.b16 %v503, %v501
    %v606 = vpack.c.b16 %v504, %v502
    %v607 = vpack.c.b16 %v507, %v505
    %v608 = vpack.c.b16 %v508, %v506
    %v609 = vpack.c.b16 %v511, %v509
    %v610 = vpack.c.b16 %v512, %v510
    %v611 = vpack.c.b16 %v515, %v513
    %v612 = vpack.c.b16 %v516, %v514
    %709 = vmatprep.subr.bf16.mxu0 %v518
    %710 = vmatpush1.bf16.msra.mxu0 %v517
    %711 = vmatprep.subr.bf16.mxu0 %v520
    %712 = vmatpush1.bf16.msra.mxu0 %v519
    %713 = vmatprep.subr.bf16.mxu0 %v522
    %714 = vmatpush1.bf16.msra.mxu0 %v521
    %715 = vmatprep.subr.bf16.mxu0 %v524
    %716 = vmatpush1.bf16.msra.mxu0 %v523
    %717 = vmatprep.subr.bf16.mxu0 %v526
    %718 = vmatpush1.bf16.msra.mxu0 %v525
    %719 = vmatprep.subr.bf16.mxu0 %v528
    %720 = vmatpush1.bf16.msra.mxu0 %v527
    %721 = vmatprep.subr.bf16.mxu0 %v530
    %722 = vmatpush1.bf16.msra.mxu0 %v529
    %723 = vmatprep.subr.bf16.mxu0 %v532
    %724 = vmatpush1.bf16.msra.mxu0 %v531
    %725 = vmatprep.subr.bf16.mxu0 %v534
    %726 = vmatpush1.bf16.msra.mxu0 %v533
    %727 = vmatprep.subr.bf16.mxu0 %v536
    %728 = vmatpush1.bf16.msra.mxu0 %v535
    %729 = vmatprep.subr.bf16.mxu0 %v538
    %730 = vmatpush1.bf16.msra.mxu0 %v537
    %731 = vmatprep.subr.bf16.mxu0 %v540
    %732 = vmatpush1.bf16.msra.mxu0 %v539
    %733 = vmatprep.subr.bf16.mxu0 %v542
    %734 = vmatpush1.bf16.msra.mxu0 %v541
    %735 = vmatprep.subr.bf16.mxu0 %v544
    %736 = vmatpush1.bf16.msra.mxu0 %v543
    %737 = vmatprep.subr.bf16.mxu0 %v546
    %738 = vmatpush1.bf16.msra.mxu0 %v545
    %739 = vmatprep.subr.bf16.mxu0 %v548
    %740 = vmatpush1.bf16.msra.mxu0 %v547
    %741 = vmatprep.mubr.bf16.mxu0 %v218
    %742 = vmatmul.mubr.bf16.gmra.mrb[0].mxu0 %v217
    %v743 = vpop.f32.mrb[0].mxu0
    %v744 = vadd.f32 %v201, %v743
    %v745 = vpop.f32.mrb[0].mxu0
    %v746 = vadd.f32 %v205, %v745
    %v747 = vpop.f32.mrb[0].mxu0
    %v748 = vpop.f32.mrb[0].mxu0
    %749 = vdwg.mxu0
    %750 = vmatprep.subr.bf16.mxu0 %v550
    %751 = vmatpush1.bf16.msra.mxu0 %v549
    %752 = vmatprep.subr.bf16.mxu0 %v552
    %753 = vmatpush1.bf16.msra.mxu0 %v551
    %754 = vmatprep.subr.bf16.mxu0 %v554
    %755 = vmatpush1.bf16.msra.mxu0 %v553
    %756 = vmatprep.subr.bf16.mxu0 %v556
    %757 = vmatpush1.bf16.msra.mxu0 %v555
    %758 = vmatprep.subr.bf16.mxu0 %v558
    %759 = vmatpush1.bf16.msra.mxu0 %v557
    %760 = vmatprep.subr.bf16.mxu0 %v560
    %761 = vmatpush1.bf16.msra.mxu0 %v559
    %762 = vmatprep.subr.bf16.mxu0 %v562
    %763 = vmatpush1.bf16.msra.mxu0 %v561
    %764 = vmatprep.subr.bf16.mxu0 %v564
    %765 = vmatpush1.bf16.msra.mxu0 %v563
    %766 = vmatprep.subr.bf16.mxu0 %v566
    %767 = vmatpush1.bf16.msra.mxu0 %v565
    %768 = vmatprep.subr.bf16.mxu0 %v568
    %769 = vmatpush1.bf16.msra.mxu0 %v567
    %770 = vmatprep.subr.bf16.mxu0 %v570
    %771 = vmatpush1.bf16.msra.mxu0 %v569
    %772 = vmatprep.subr.bf16.mxu0 %v572
    %773 = vmatpush1.bf16.msra.mxu0 %v571
    %774 = vmatprep.subr.bf16.mxu0 %v574
    %775 = vmatpush1.bf16.msra.mxu0 %v573
    %776 = vmatprep.subr.bf16.mxu0 %v576
    %777 = vmatpush1.bf16.msra.mxu0 %v575
    %778 = vmatprep.subr.bf16.mxu0 %v578
    %779 = vmatpush1.bf16.msra.mxu0 %v577
    %780 = vmatprep.subr.bf16.mxu0 %v580
    %781 = vmatpush1.bf16.msra.mxu0 %v579
    %782 = vmatprep.mubr.bf16.mxu0 %v220
    %783 = vmatmul.mubr.bf16.gmra.mrb[0].mxu0 %v219
    %v784 = vpop.f32.mrb[0].mxu0
    %v785 = vadd.f32 %v744, %v784
    %v786 = vpop.f32.mrb[0].mxu0
    %v787 = vadd.f32 %v746, %v786
    %v788 = vpop.f32.mrb[0].mxu0
    %v789 = vpop.f32.mrb[0].mxu0
    %790 = vdwg.mxu0
    %791 = vmatprep.subr.bf16.mxu0 %v582
    %792 = vmatpush1.bf16.msra.mxu0 %v581
    %793 = vmatprep.subr.bf16.mxu0 %v584
    %794 = vmatpush1.bf16.msra.mxu0 %v583
    %795 = vmatprep.subr.bf16.mxu0 %v586
    %796 = vmatpush1.bf16.msra.mxu0 %v585
    %797 = vmatprep.subr.bf16.mxu0 %v588
    %798 = vmatpush1.bf16.msra.mxu0 %v587
    %799 = vmatprep.subr.bf16.mxu0 %v590
    %800 = vmatpush1.bf16.msra.mxu0 %v589
    %801 = vmatprep.subr.bf16.mxu0 %v592
    %802 = vmatpush1.bf16.msra.mxu0 %v591
    %803 = vmatprep.subr.bf16.mxu0 %v594
    %804 = vmatpush1.bf16.msra.mxu0 %v593
    %805 = vmatprep.subr.bf16.mxu0 %v596
    %806 = vmatpush1.bf16.msra.mxu0 %v595
    %807 = vmatprep.subr.bf16.mxu0 %v598
    %808 = vmatpush1.bf16.msra.mxu0 %v597
    %809 = vmatprep.subr.bf16.mxu0 %v600
    %810 = vmatpush1.bf16.msra.mxu0 %v599
    %811 = vmatprep.subr.bf16.mxu0 %v602
    %812 = vmatpush1.bf16.msra.mxu0 %v601
    %813 = vmatprep.subr.bf16.mxu0 %v604
    %814 = vmatpush1.bf16.msra.mxu0 %v603
    %815 = vmatprep.subr.bf16.mxu0 %v606
    %816 = vmatpush1.bf16.msra.mxu0 %v605
    %817 = vmatprep.subr.bf16.mxu0 %v608
    %818 = vmatpush1.bf16.msra.mxu0 %v607
    %819 = vmatprep.subr.bf16.mxu0 %v610
    %820 = vmatpush1.bf16.msra.mxu0 %v609
    %821 = vmatprep.subr.bf16.mxu0 %v612
    %822 = vmatpush1.bf16.msra.mxu0 %v611
    %823 = vmatprep.mubr.bf16.mxu0 %v222
    %824 = vmatmul.mubr.bf16.gmra.mrb[0].mxu0 %v221
    %v825 = vpop.f32.mrb[0].mxu0
    %v826 = vadd.f32 %v785, %v825
    %v827 = vpop.f32.mrb[0].mxu0
    %v828 = vadd.f32 %v787, %v827
    %v829 = vpop.f32.mrb[0].mxu0
    %v830 = vpop.f32.mrb[0].mxu0
    %831 = vdwg.mxu0
    %v832 = vmax.f32 %v826, 0.0
    %v833 = vmax.f32 %v828, 0.0
    %v834 = vpack.c.bf16 %v832, %v832
    %v835 = vpack.c.bf16 %v833, %v833
    %v836 = vld [vmem:[#allocation8] sm:$0xf]
    %v837 = vld [vmem:[#allocation8 + $0x4] sm:$0xf]
    %v838 = vld [vmem:[#allocation8 + $0x8] sm:$0xf]
    %v839 = vld [vmem:[#allocation8 + $0xc] sm:$0xf]
    %v840 = vld [vmem:[#allocation8 + $0x10] sm:$0xf]
    %v841 = vld [vmem:[#allocation8 + $0x14] sm:$0xf]
    %v842 = vld [vmem:[#allocation8 + $0x18] sm:$0xf]
    %v843 = vld [vmem:[#allocation8 + $0x1c] sm:$0xf]
    %v844 = vld [vmem:[#allocation8 + $0x20] sm:$0xf]
    %v845 = vld [vmem:[#allocation8 + $0x24] sm:$0xf]
    %v846 = vld [vmem:[#allocation8 + $0x28] sm:$0xf]
    %v847 = vld [vmem:[#allocation8 + $0x2c] sm:$0xf]
    %v848 = vld [vmem:[#allocation8 + $0x30] sm:$0xf]
    %v849 = vld [vmem:[#allocation8 + $0x34] sm:$0xf]
    %v850 = vld [vmem:[#allocation8 + $0x38] sm:$0xf]
    %v851 = vld [vmem:[#allocation8 + $0x3c] sm:$0xf]
    %v852 = vld [vmem:[#allocation8 + $0x40] sm:$0xf]
    %v853 = vld [vmem:[#allocation8 + $0x44] sm:$0xf]
    %v854 = vld [vmem:[#allocation8 + $0x48] sm:$0xf]
    %v855 = vld [vmem:[#allocation8 + $0x4c] sm:$0xf]
    %v856 = vld [vmem:[#allocation8 + $0x50] sm:$0xf]
    %v857 = vld [vmem:[#allocation8 + $0x54] sm:$0xf]
    %v858 = vld [vmem:[#allocation8 + $0x58] sm:$0xf]
    %v859 = vld [vmem:[#allocation8 + $0x5c] sm:$0xf]
    %v860 = vld [vmem:[#allocation8 + $0x60] sm:$0xf]
    %v861 = vld [vmem:[#allocation8 + $0x64] sm:$0xf]
    %v862 = vld [vmem:[#allocation8 + $0x68] sm:$0xf]
    %v863 = vld [vmem:[#allocation8 + $0x6c] sm:$0xf]
    %v864 = vld [vmem:[#allocation8 + $0x70] sm:$0xf]
    %v865 = vld [vmem:[#allocation8 + $0x74] sm:$0xf]
    %v866 = vld [vmem:[#allocation8 + $0x78] sm:$0xf]
    %v867 = vld [vmem:[#allocation8 + $0x7c] sm:$0xf]
    %v868 = vld [vmem:[%s5] sm:$0x1]
    %v870 = vlaneseq
    %v871 = vshrl.u32 %v870, 7
    %v872 = vsub.s32 0, %v871
    %v873 = vrot.slane %v868, %v872
    %v907 = vunpack.c.l.b16 %v836
    %v908 = vunpack.c.l.b16 %v837
    %v909 = vunpack.c.l.b16 %v838
    %v910 = vunpack.c.l.b16 %v839
    %v911 = vunpack.c.l.b16 %v840
    %v912 = vunpack.c.l.b16 %v841
    %v913 = vunpack.c.l.b16 %v842
    %v914 = vunpack.c.l.b16 %v843
    %v915 = vunpack.c.l.b16 %v844
    %v916 = vunpack.c.l.b16 %v845
    %v917 = vunpack.c.l.b16 %v846
    %v918 = vunpack.c.l.b16 %v847
    %v919 = vunpack.c.l.b16 %v848
    %v920 = vunpack.c.l.b16 %v849
    %v921 = vunpack.c.l.b16 %v850
    %v922 = vunpack.c.l.b16 %v851
    %v923 = vunpack.c.l.b16 %v852
    %v924 = vunpack.c.l.b16 %v853
    %v925 = vunpack.c.l.b16 %v854
    %v926 = vunpack.c.l.b16 %v855
    %v927 = vunpack.c.l.b16 %v856
    %v928 = vunpack.c.l.b16 %v857
    %v929 = vunpack.c.l.b16 %v858
    %v930 = vunpack.c.l.b16 %v859
    %v931 = vunpack.c.l.b16 %v860
    %v932 = vunpack.c.l.b16 %v861
    %v933 = vunpack.c.l.b16 %v862
    %v934 = vunpack.c.l.b16 %v863
    %v935 = vunpack.c.l.b16 %v864
    %v936 = vunpack.c.l.b16 %v865
    %v937 = vunpack.c.l.b16 %v866
    %v938 = vunpack.c.l.b16 %v867
    %v939 = vpack.c.b16 %v908, %v907
    %v940 = vpack.c.b16 %v910, %v909
    %v941 = vpack.c.b16 %v912, %v911
    %v942 = vpack.c.b16 %v914, %v913
    %v943 = vpack.c.b16 %v916, %v915
    %v944 = vpack.c.b16 %v918, %v917
    %v945 = vpack.c.b16 %v920, %v919
    %v946 = vpack.c.b16 %v922, %v921
    %v947 = vpack.c.b16 %v924, %v923
    %v948 = vpack.c.b16 %v926, %v925
    %v949 = vpack.c.b16 %v928, %v927
    %v950 = vpack.c.b16 %v930, %v929
    %v951 = vpack.c.b16 %v932, %v931
    %v952 = vpack.c.b16 %v934, %v933
    %v953 = vpack.c.b16 %v936, %v935
    %v954 = vpack.c.b16 %v938, %v937
    %971 = vmatprep.subr.bf16.mxu0 0
    %972 = vmatpush1.bf16.msra.mxu0 %v939
    %973 = vmatprep.subr.bf16.mxu0 0
    %974 = vmatpush1.bf16.msra.mxu0 %v940
    %975 = vmatprep.subr.bf16.mxu0 0
    %976 = vmatpush1.bf16.msra.mxu0 %v941
    %977 = vmatprep.subr.bf16.mxu0 0
    %978 = vmatpush1.bf16.msra.mxu0 %v942
    %979 = vmatprep.subr.bf16.mxu0 0
    %980 = vmatpush1.bf16.msra.mxu0 %v943
    %981 = vmatprep.subr.bf16.mxu0 0
    %982 = vmatpush1.bf16.msra.mxu0 %v944
    %983 = vmatprep.subr.bf16.mxu0 0
    %984 = vmatpush1.bf16.msra.mxu0 %v945
    %985 = vmatprep.subr.bf16.mxu0 0
    %986 = vmatpush1.bf16.msra.mxu0 %v946
    %987 = vmatprep.subr.bf16.mxu0 0
    %988 = vmatpush1.bf16.msra.mxu0 %v947
    %989 = vmatprep.subr.bf16.mxu0 0
    %990 = vmatpush1.bf16.msra.mxu0 %v948
    %991 = vmatprep.subr.bf16.mxu0 0
    %992 = vmatpush1.bf16.msra.mxu0 %v949
    %993 = vmatprep.subr.bf16.mxu0 0
    %994 = vmatpush1.bf16.msra.mxu0 %v950
    %995 = vmatprep.subr.bf16.mxu0 0
    %996 = vmatpush1.bf16.msra.mxu0 %v951
    %997 = vmatprep.subr.bf16.mxu0 0
    %998 = vmatpush1.bf16.msra.mxu0 %v952
    %999 = vmatprep.subr.bf16.mxu0 0
    %1000 = vmatpush1.bf16.msra.mxu0 %v953
    %1001 = vmatprep.subr.bf16.mxu0 0
    %1002 = vmatpush1.bf16.msra.mxu0 %v954
    %1003 = vmatprep.mubr.bf16.mxu0 %v835
    %1004 = vmatmul.mubr.bf16.gmra.mrb[0].mxu0 %v834
    %v1005 = vpop.f32.mrb[0].mxu0
    %v1006 = vadd.f32 %v873, %v1005
    %v1007 = vpop.f32.mrb[0].mxu0
    %v1008 = vpop.f32.mrb[0].mxu0
    %v1009 = vpop.f32.mrb[0].mxu0
    %1010 = vdwg.mxu0
    %v1011 = vld [vmem:[#allocation5] sm:$0xf]
    %v1012 = vld [vmem:[#allocation5 + $0x4] sm:$0xf]
    %v1013 = vld [vmem:[#allocation5 + $0x8] sm:$0xf]
    %v1014 = vld [vmem:[#allocation10] sm:$0xf]
    %v1015 = vld [vmem:[#allocation10 + $0x4] sm:$0xf]
    %v1016 = vld [vmem:[#allocation10 + $0x8] sm:$0xf]
    %v1017 = vld [vmem:[#allocation10 + $0xc] sm:$0xf]
    %v1018 = vld [vmem:[#allocation10 + $0x10] sm:$0xf]
    %v1019 = vld [vmem:[#allocation10 + $0x14] sm:$0xf]
    %v1020 = vld [vmem:[#allocation10 + $0x18] sm:$0xf]
    %v1021 = vld [vmem:[#allocation10 + $0x1c] sm:$0xf]
    %v1022 = vld [vmem:[%s7] sm:$0x1]
    %v1024 = vlaneseq
    %v1025 = vshrl.u32 %v1024, 7
    %v1026 = vsub.s32 0, %v1025
    %v1027 = vrot.slane %v1022, %v1026
    %v1032 = vunpack.c.l.b16 %v1011
    %v1033 = vunpack.c.l.b16 %v1012
    %v1034 = vunpack.c.l.b16 %v1013
    %v1035 = vpack.c.b16 %v1033, %v1032
    %v1036 = vpack.c.b16 %v1034, %v1034
    %v1045 = vunpack.c.l.b16 %v1014
    %v1046 = vunpack.c.l.b16 %v1015
    %v1047 = vunpack.c.l.b16 %v1016
    %v1048 = vunpack.c.l.b16 %v1017
    %v1049 = vunpack.c.l.b16 %v1018
    %v1050 = vunpack.c.l.b16 %v1019
    %v1051 = vunpack.c.l.b16 %v1020
    %v1052 = vunpack.c.l.b16 %v1021
    %v1053 = vpack.c.b16 %v1046, %v1045
    %v1054 = vpack.c.b16 %v1048, %v1047
    %v1055 = vpack.c.b16 %v1050, %v1049
    %v1056 = vpack.c.b16 %v1052, %v1051
    %vm1061 = vcmask 523264
    %v1063 = vsel %vm1061, %v1035, 0
    %v1066 = vsel %vm1061, %v1036, 0
    %1068 = vmatprep.subr.bf16.mxu0 0
    %1069 = vmatpush1.bf16.msra.mxu0 %v1053
    %1070 = vmatprep.subr.bf16.mxu0 0
    %1071 = vmatpush1.bf16.msra.mxu0 %v1054
    %1072 = vmatprep.subr.bf16.mxu0 0
    %1073 = vmatpush1.bf16.msra.mxu0 %v1055
    %1074 = vmatprep.subr.bf16.mxu0 0
    %1075 = vmatpush1.bf16.msra.mxu0 %v1056
    %1076 = vmatprep.subr.bf16.mxu0 0
    %1077 = vmatpush1.bf16.msra.mxu0 0
    %1078 = vmatprep.subr.bf16.mxu0 0
    %1079 = vmatpush1.bf16.msra.mxu0 0
    %1080 = vmatprep.subr.bf16.mxu0 0
    %1081 = vmatpush1.bf16.msra.mxu0 0
    %1082 = vmatprep.subr.bf16.mxu0 0
    %1083 = vmatpush1.bf16.msra.mxu0 0
    %1084 = vmatprep.subr.bf16.mxu0 0
    %1085 = vmatpush1.bf16.msra.mxu0 0
    %1086 = vmatprep.subr.bf16.mxu0 0
    %1087 = vmatpush1.bf16.msra.mxu0 0
    %1088 = vmatprep.subr.bf16.mxu0 0
    %1089 = vmatpush1.bf16.msra.mxu0 0
    %1090 = vmatprep.subr.bf16.mxu0 0
    %1091 = vmatpush1.bf16.msra.mxu0 0
    %1092 = vmatprep.subr.bf16.mxu0 0
    %1093 = vmatpush1.bf16.msra.mxu0 0
    %1094 = vmatprep.subr.bf16.mxu0 0
    %1095 = vmatpush1.bf16.msra.mxu0 0
    %1096 = vmatprep.subr.bf16.mxu0 0
    %1097 = vmatpush1.bf16.msra.mxu0 0
    %1098 = vmatprep.subr.bf16.mxu0 0
    %1099 = vmatpush1.bf16.msra.mxu0 0
    %1100 = vmatprep.mubr.bf16.mxu0 0
    %1101 = vmatmul.mubr.bf16.gmra.mrb[0].mxu0 %v1063
    %v1102 = vpop.f32.mrb[0].mxu0
    %v1103 = vadd.f32 %v1027, %v1102
    %v1104 = vpop.f32.mrb[0].mxu0
    %v1105 = vpop.f32.mrb[0].mxu0
    %v1106 = vadd.f32 %v1027, %v1105
    %v1107 = vpop.f32.mrb[0].mxu0
    %1108 = vmatprep.mubr.bf16.mxu0 0
    %1109 = vmatmul.mubr.bf16.gmra.mrb[0].mxu0 %v1066
    %v1110 = vpop.f32.mrb[0].mxu0
    %v1111 = vadd.f32 %v1027, %v1110
    %v1112 = vpop.f32.mrb[0].mxu0
    %v1113 = vpop.f32.mrb[0].mxu0
    %v1114 = vpop.f32.mrb[0].mxu0
    %1115 = vdwg.mxu0
    %v1116 = vmul.f32 %v1006, %v1006
    %1117 = vadd.xlane.f32.xlu0 %v1116
    %v1118 = vpop.xlane.xlu0 %1117
    %v1119 = vmax.f32 %v1118, 1e-16
    %v1120 = vrsqrt.pop %v1119
    %v1121 = vmul.f32 %v1103, %v1006
    %v1122 = vmul.f32 %v1106, %v1006
    %v1123 = vmul.f32 %v1111, %v1006
    %1124 = vadd.xlane.f32.xlu0 %v1121
    %v1125 = vpop.xlane.xlu0 %1124
    %1126 = vadd.xlane.f32.xlu0 %v1122
    %v1127 = vpop.xlane.xlu0 %1126
    %1128 = vadd.xlane.f32.xlu0 %v1123
    %v1129 = vpop.xlane.xlu0 %1128
    %v1130 = vmul.f32 %v1103, %v1103
    %v1131 = vmul.f32 %v1106, %v1106
    %v1132 = vmul.f32 %v1111, %v1111
    %1133 = vadd.xlane.f32.xlu0 %v1130
    %v1134 = vpop.xlane.xlu0 %1133
    %1135 = vadd.xlane.f32.xlu0 %v1131
    %v1136 = vpop.xlane.xlu0 %1135
    %1137 = vadd.xlane.f32.xlu0 %v1132
    %v1138 = vpop.xlane.xlu0 %1137
    %v1139 = vmax.f32 %v1134, 1e-16
    %v1140 = vmax.f32 %v1136, 1e-16
    %v1141 = vmax.f32 %v1138, 1e-16
    %v1142 = vrsqrt.pop %v1139
    %v1143 = vrsqrt.pop %v1140
    %v1144 = vrsqrt.pop %v1141
    %v1145 = vmul.f32 %v1125, %v1142
    %v1146 = vmul.f32 %v1127, %v1143
    %v1147 = vmul.f32 %v1129, %v1144
    %v1148 = vmul.f32 %v1145, %v1120
    %v1149 = vmul.f32 %v1146, %v1120
    %v1150 = vmul.f32 %v1147, %v1120
    %v1151 = vsub.f32 1.0, %v1148
    %vm1152 = vcmask 7168
    %v1153 = vsel %vm1152, %v1151, 0.0
    %1154 = vadd.xlane.f32.xlu0 %v1153
    %v1155 = vpop.xlane.xlu0 %1154
    %v1156 = vrot.slane %v1155, 4
    %v1157 = vadd.f32 %v1155, %v1156
    %v1158 = vrot.slane %v1157, 2
    %v1159 = vadd.f32 %v1157, %v1158
    %v1160 = vrot.slane %v1159, 1
    %v1161 = vadd.f32 %v1159, %v1160
    %s1162 = vtos %v1161
    %v1163 = vrcp.pop 8.0
    %s1164 = vtos %v1163
    %s1165 = smul.f32 %s1162, %s1164
    %v1166 = vmax.f32 %v1149, 0.0
    %v1167 = vsel %vm1152, %v1166, 0.0
    %1168 = vadd.xlane.f32.xlu0 %v1167
    %v1169 = vpop.xlane.xlu0 %1168
    %v1170 = vrot.slane %v1169, 4
    %v1171 = vadd.f32 %v1169, %v1170
    %v1172 = vrot.slane %v1171, 2
    %v1173 = vadd.f32 %v1171, %v1172
    %v1174 = vrot.slane %v1173, 1
    %v1175 = vadd.f32 %v1173, %v1174
    %s1176 = vtos %v1175
    %v1177 = vrcp.pop 8.0
    %s1178 = vtos %v1177
    %s1179 = smul.f32 %s1176, %s1178
    %v1180 = vmax.f32 %v1150, 0.0
    %v1181 = vsel %vm1152, %v1180, 0.0
    %1182 = vadd.xlane.f32.xlu0 %v1181
    %v1183 = vpop.xlane.xlu0 %1182
    %v1184 = vrot.slane %v1183, 4
    %v1185 = vadd.f32 %v1183, %v1184
    %v1186 = vrot.slane %v1185, 2
    %v1187 = vadd.f32 %v1185, %v1186
    %v1188 = vrot.slane %v1187, 1
    %v1189 = vadd.f32 %v1187, %v1188
    %s1190 = vtos %v1189
    %v1191 = vrcp.pop 8.0
    %s1192 = vtos %v1191
    %s1193 = smul.f32 %s1190, %s1192
    %s1194 = sadd.f32 %s1165, %s1179
    %s1195 = sadd.f32 %s1194, %s1193
    %s1196 = scalar_lea.smem [#allocation11], 0
    %1197 = sst [smem:[%s1196]] %s1195
    // Predicated region
    $region54: #{tpu_custom_call.1} parent=1 // pred_check
      _
    $region55: #{tpu_custom_call.1} parent=1 // pred_check_branch
      %1199 = sbr.rel (0) target = $region57
    $region56: #{tpu_custom_call.1} parent=1 // pred_region
      %s1201 = ssub.s32 16, 16
      %1202 = vsyncadd [#allocation4], %s1201
      %1205 = dma.smem_to_hbm [#allocation11], 16, %s8, [#allocation4]
    $region57: #{tpu_custom_call.1} parent=1 // pred_fallthru
      _
    // Predicated region
    $region58: #{tpu_custom_call.1} parent=1 // pred_check
      _
    $region59: #{tpu_custom_call.1} parent=1 // pred_check_branch
      %1207 = sbr.rel (0) target = $region61
    $region60: #{tpu_custom_call.1} parent=1 // pred_region
      %1208 = dma.done [#allocation4], 16
    $region61: #{tpu_custom_call.1} parent=1 // pred_fallthru
      _
    %1209 = sfence
    %1210 = vsyncpa [#allocation3], 1
    %1211 = vsyncpa [#allocation6], 1
    %1212 = vsyncpa [#allocation9], 1
    %1213 = vsyncpa [#allocation4], 1

</llo_original>
